<compile_context>
chip_gen: v5e
topology: v5e:2x2
jax: 0.10.0
libtpu: 0.0.40
codegen_flags: <defaults>
</compile_context>

<pallas_src>
import functools

import jax
import jax.numpy as jnp
from jax.experimental import pallas as pl
from jax.experimental.pallas import tpu as pltpu

_USE_ROLL = True            # pltpu.roll (XLU rotate); set False for the jnp.roll concat fallback
_BF16_INTERMEDIATES = True  # keep shifts/selects/subs in bf16 for bf16 inputs (v6e/v7x); False on v5e
_BLOCK_ELEMS = 1 << 19      # ~512K elements per (planes x H*W) input block (~2 MiB in f32)


def _gp_loss_kernel(wcol_ref, x_ref, y_ref, partial_ref, *,
                    plane_h, plane_w, use_roll, f32_shifts):
    hw = plane_h * plane_w
    x = x_ref[...]
    y = y_ref[...]
    if f32_shifts:
        x = x.astype(jnp.float32)
        y = y.astype(jnp.float32)

    wcol = wcol_ref[...]                                      # (1, H*W): flat index % W
    flat = jax.lax.broadcasted_iota(jnp.int32, (1, hw), 1)    # (1, H*W): flat index

    m_r = wcol == plane_w - 1                 # w == W-1 : right neighbour is zero padding
    m_l = wcol == 0                           # w == 0   : left  neighbour is zero padding
    m_t = flat < plane_w                      # h == 0   : top   neighbour is zero padding
    m_b = flat >= (plane_h - 1) * plane_w     # h == H-1 : bottom neighbour is zero padding

    def shift(v, k):
        # out[f] = v[(f - k) % hw] along the flattened plane axis; every wrapped lane is
        # forced to zero by the caller's masks, so wrap-around never leaks into the result.
        if use_roll:
            return pltpu.roll(v, shift=k % hw, axis=1)        # XLU rotate, no VMEM copies
        return jnp.roll(v, k, axis=1)                         # concat-of-slices fallback

    def grad_map2(v):
        # Returns 2 * gradient_map(v): the 0.5 scale is folded into the wrapper, since
        # 0.5*sqrt(a^2 + b^2 + 4e-6) == sqrt((0.5a)^2 + (0.5b)^2 + 1e-6).
        zero = jnp.zeros((), v.dtype)
        r = jnp.where(m_r, zero, shift(v, -1))                # v[h, w+1]
        l = jnp.where(m_l, zero, shift(v, 1))                 # v[h, w-1]
        t = jnp.where(m_t, zero, shift(v, plane_w))           # v[h-1, w]
        b = jnp.where(m_b, zero, shift(v, -plane_w))          # v[h+1, w]
        dx = (r - l).astype(jnp.float32)
        dy = (t - b).astype(jnp.float32)
        return jnp.sqrt(dx * dx + dy * dy + 4e-6)

    d = jnp.abs(grad_map2(x) - grad_map2(y))                  # (Bc, H*W) f32
    # Sublane-only reduction; lane-dense store of the per-step partial row. The wrapper's
    # jnp.sum finishes the cross-lane / cross-step reduction.
    partial_ref[...] = jnp.sum(d, axis=0, keepdims=True).reshape(1, 1, hw)


def _choose_block_planes(num_planes, hw):
    bc_cap = max(1, _BLOCK_ELEMS // hw)
    if bc_cap >= num_planes:
        # Whole problem fits one block.  Split into >=2 parallel steps when that is free so
        # both v7x TensorCores get work; otherwise keep the single full block.
        if num_planes >= 16 and num_planes % 16 == 0:
            return num_planes // 2
        return num_planes
    # Multiple blocks: the second-minor block dim must be a multiple of 8 (or the full extent).
    # Prefer a divisor of num_planes so no host-side padding copy is ever materialized.
    best = 0
    for d in range(8, min(bc_cap, num_planes) + 1, 8):
        if num_planes % d == 0:
            best = d
    if best:
        return best
    # TODO(synk): handle the ragged last block in-kernel (or tile very large planes along H with
    # a 1-row halo) instead of falling back to a padded HBM copy / an 8-plane floor.
    return max(8, (bc_cap // 8) * 8)


def _vmem_limit_bytes(bc, hw, itemsize, f32_shifts):
    # 2 inputs x 2 pipeline buffers of the input block, plus in-kernel temporaries
    # (conservative: ~8 live f32 plane-blocks; fewer bytes when the shift phase stays bf16).
    in_bytes = 2 * 2 * bc * hw * itemsize
    tmp_bytes = bc * hw * (32 if f32_shifts else 24)
    need = in_bytes + tmp_bytes + (2 << 20)
    try:
        cap = pltpu.get_tpu_info().vmem_capacity_bytes   # 64 MiB/TC on v7x, 128 MiB on v5e/v6e
    except Exception:
        cap = 64 << 20
    return int(min(max(32 << 20, need), max(32 << 20, cap - (16 << 20))))


def _build_pallas_call(num_steps, bc, hw, plane_h, plane_w, in_dtype, f32_shifts):
    kernel = functools.partial(_gp_loss_kernel, plane_h=plane_h, plane_w=plane_w,
                               use_roll=_USE_ROLL, f32_shifts=f32_shifts)
    itemsize = jnp.dtype(in_dtype).itemsize
    return pl.pallas_call(
        kernel,
        out_shape=jax.ShapeDtypeStruct((num_steps, 1, hw), jnp.float32),
        grid_spec=pltpu.PrefetchScalarGridSpec(
            num_scalar_prefetch=0,
            grid=(num_steps,),
            in_specs=[
                pl.BlockSpec((1, hw), lambda i: (0, 0)),    # wcol edge-mask helper (resident)
                pl.BlockSpec((bc, hw), lambda i: (i, 0)),   # out_images planes
                pl.BlockSpec((bc, hw), lambda i: (i, 0)),   # target_images planes
            ],
            out_specs=pl.BlockSpec((1, 1, hw), lambda i: (i, 0, 0)),
        ),
        compiler_params=pltpu.CompilerParams(
            dimension_semantics=("parallel",),   # independent per-step partials (megacore-safe)
            vmem_limit_bytes=_vmem_limit_bytes(bc, hw, itemsize, f32_shifts),
        ),
    )


def gradient_prior_loss(out_images, target_images):
    """out_images, target_images: (N, C, H, W). Returns the scalar L1 gradient-prior loss."""
    assert out_images.shape == target_images.shape
    N, C, H, W = out_images.shape
    num_planes, hw = N * C, H * W

    f32_shifts = not (_BF16_INTERMEDIATES and out_images.dtype == jnp.bfloat16)
    bc = _choose_block_planes(num_planes, hw)

    # Lane-dense, transpose-free layout: each plane becomes one row of H*W elements.
    x = out_images.reshape(num_planes, hw)
    y = target_images.reshape(num_planes, hw)
    padded = -(-num_planes // bc) * bc
    if padded != num_planes:
        # Only reached when num_planes has no suitable divisor (see _choose_block_planes).
        # Zero planes have identical gradient maps for x and y -> contribute exactly 0.
        x = jnp.pad(x, ((0, padded - num_planes), (0, 0)))
        y = jnp.pad(y, ((0, padded - num_planes), (0, 0)))
    num_steps = padded // bc

    # Per-lane "w" coordinate of the flattened plane (left/right edge masks).
    wcol = (jnp.arange(hw, dtype=jnp.int32) % W).reshape(1, hw)

    partials = _build_pallas_call(num_steps, bc, hw, H, W, x.dtype, f32_shifts)(wcol, x, y)

    # The kernel accumulates 2x the gradient maps; restore the 0.5 here, then take the mean.
    total = jnp.sum(partials) * jnp.float32(0.5)
    return (total / jnp.float32(num_planes * hw)).astype(out_images.dtype)


# ---------------------------------------------------------------------------
# Pure-JAX reference (mirrors the PyTorch module) for validation.
# ---------------------------------------------------------------------------
def _gradient_map_ref(x):
    h, w = x.shape[-2], x.shape[-1]
    r = jnp.pad(x, ((0, 0), (0, 0), (0, 0), (0, 1)))[:, :, :, 1:]
    l = jnp.pad(x, ((0, 0), (0, 0), (0, 0), (1, 0)))[:, :, :, :w]
    t = jnp.pad(x, ((0, 0), (0, 0), (1, 0), (0, 0)))[:, :, :h, :]
    b = jnp.pad(x, ((0, 0), (0, 0), (0, 1), (0, 0)))[:, :, 1:, :]
    return jnp.sqrt(((r - l) * 0.5) ** 2 + ((t - b) * 0.5) ** 2 + 1e-6)


def _loss_ref(out_images, target_images):
    return jnp.mean(jnp.abs(_gradient_map_ref(out_images) - _gradient_map_ref(target_images)))


if __name__ == "__main__":
    key = jax.random.PRNGKey(0)
    k1, k2 = jax.random.split(key)
    N, C, H, W = 2, 4, 16, 16
    out_images = jax.random.normal(k1, (N, C, H, W), dtype=jnp.float32)
    target_images = jax.random.normal(k2, (N, C, H, W), dtype=jnp.float32)

    loss = jax.block_until_ready(gradient_prior_loss(out_images, target_images))

    ref = jax.block_until_ready(_loss_ref(out_images, target_images))
    assert jnp.allclose(loss, ref, rtol=1e-4, atol=1e-6), (loss, ref)

    print("KERNEL_OK")
</pallas_src>

<mosaic_0001>
module attributes {stable_mosaic.version = 11 : i64} {
  func.func @_gp_loss_kernel(%arg0: i32, %arg1: memref<1x256xi32, #tpu.memory_space<vmem>>, %arg2: memref<8x256xf32, #tpu.memory_space<vmem>>, %arg3: memref<8x256xf32, #tpu.memory_space<vmem>>, %arg4: memref<1x1x256xf32, #tpu.memory_space<vmem>>) attributes {dimension_semantics = [#tpu.dimension_semantics<parallel>], iteration_bounds = array<i64: 1>, scalar_prefetch = 0 : i64, scratch_operands = 0 : i64, tpu.core_type = #tpu.core_type<tc>, window_params = [{pipeline_mode = #tpu.pipeline_mode<synchronous>, transform_indices = @transform_0, window_bounds = array<i64: 1, 256>}, {transform_indices = @transform_1, window_bounds = array<i64: 8, 256>}, {transform_indices = @transform_2, window_bounds = array<i64: 8, 256>}, {transform_indices = @transform_3, window_bounds = array<i64: 1, 1, 256>}]} {
    %c0 = arith.constant 0 : index
    %c0_0 = arith.constant 0 : index
    %0 = vector.load %arg2[%c0, %c0_0] : memref<8x256xf32, #tpu.memory_space<vmem>>, vector<8x256xf32>
    %c0_1 = arith.constant 0 : index
    %c0_2 = arith.constant 0 : index
    %1 = vector.load %arg3[%c0_1, %c0_2] : memref<8x256xf32, #tpu.memory_space<vmem>>, vector<8x256xf32>
    %c0_3 = arith.constant 0 : index
    %c0_4 = arith.constant 0 : index
    %2 = vector.load %arg1[%c0_3, %c0_4] : memref<1x256xi32, #tpu.memory_space<vmem>>, vector<1x256xi32>
    %3 = tpu.iota {dimensions = array<i32: 1>} : vector<1x256xi32>
    %c15_i32 = arith.constant 15 : i32
    %4 = vector.broadcast %c15_i32 : i32 to vector<1x256xi32>
    %5 = arith.cmpi eq, %2, %4 : vector<1x256xi32>
    %c0_i32 = arith.constant 0 : i32
    %6 = vector.broadcast %c0_i32 : i32 to vector<1x256xi32>
    %7 = arith.cmpi eq, %2, %6 : vector<1x256xi32>
    %c16_i32 = arith.constant 16 : i32
    %8 = vector.broadcast %c16_i32 : i32 to vector<1x256xi32>
    %9 = arith.cmpi slt, %3, %8 : vector<1x256xi32>
    %c240_i32 = arith.constant 240 : i32
    %10 = vector.broadcast %c240_i32 : i32 to vector<1x256xi32>
    %11 = arith.cmpi sge, %3, %10 : vector<1x256xi32>
    %c255_i32 = arith.constant 255 : i32
    %12 = tpu.dynamic_rotate %0 by %c255_i32 dim 1 : vector<8x256xf32>, i32 -> vector<8x256xf32>
    %cst = arith.constant 0.000000e+00 : f32
    %13 = vector.shape_cast %5 : vector<1x256xi1> to vector<1x256xi1>
    %14 = vector.broadcast %13 : vector<1x256xi1> to vector<8x256xi1>
    %15 = vector.broadcast %cst : f32 to vector<8x256xf32>
    %16 = arith.select %14, %15, %12 : vector<8x256xi1>, vector<8x256xf32>
    %c1_i32 = arith.constant 1 : i32
    %17 = tpu.dynamic_rotate %0 by %c1_i32 dim 1 : vector<8x256xf32>, i32 -> vector<8x256xf32>
    %cst_5 = arith.constant 0.000000e+00 : f32
    %18 = vector.shape_cast %7 : vector<1x256xi1> to vector<1x256xi1>
    %19 = vector.broadcast %18 : vector<1x256xi1> to vector<8x256xi1>
    %20 = vector.broadcast %cst_5 : f32 to vector<8x256xf32>
    %21 = arith.select %19, %20, %17 : vector<8x256xi1>, vector<8x256xf32>
    %c16_i32_6 = arith.constant 16 : i32
    %22 = tpu.dynamic_rotate %0 by %c16_i32_6 dim 1 : vector<8x256xf32>, i32 -> vector<8x256xf32>
    %cst_7 = arith.constant 0.000000e+00 : f32
    %23 = vector.shape_cast %9 : vector<1x256xi1> to vector<1x256xi1>
    %24 = vector.broadcast %23 : vector<1x256xi1> to vector<8x256xi1>
    %25 = vector.broadcast %cst_7 : f32 to vector<8x256xf32>
    %26 = arith.select %24, %25, %22 : vector<8x256xi1>, vector<8x256xf32>
    %c240_i32_8 = arith.constant 240 : i32
    %27 = tpu.dynamic_rotate %0 by %c240_i32_8 dim 1 : vector<8x256xf32>, i32 -> vector<8x256xf32>
    %cst_9 = arith.constant 0.000000e+00 : f32
    %28 = vector.shape_cast %11 : vector<1x256xi1> to vector<1x256xi1>
    %29 = vector.broadcast %28 : vector<1x256xi1> to vector<8x256xi1>
    %30 = vector.broadcast %cst_9 : f32 to vector<8x256xf32>
    %31 = arith.select %29, %30, %27 : vector<8x256xi1>, vector<8x256xf32>
    %32 = arith.subf %16, %21 : vector<8x256xf32>
    %33 = arith.subf %26, %31 : vector<8x256xf32>
    %34 = arith.mulf %32, %32 : vector<8x256xf32>
    %35 = arith.mulf %33, %33 : vector<8x256xf32>
    %36 = arith.addf %34, %35 : vector<8x256xf32>
    %cst_10 = arith.constant 4.000000e-06 : f32
    %37 = vector.broadcast %cst_10 : f32 to vector<8x256xf32>
    %38 = arith.addf %36, %37 : vector<8x256xf32>
    %39 = math.sqrt %38 : vector<8x256xf32>
    %c255_i32_11 = arith.constant 255 : i32
    %40 = tpu.dynamic_rotate %1 by %c255_i32_11 dim 1 : vector<8x256xf32>, i32 -> vector<8x256xf32>
    %cst_12 = arith.constant 0.000000e+00 : f32
    %41 = vector.shape_cast %5 : vector<1x256xi1> to vector<1x256xi1>
    %42 = vector.broadcast %41 : vector<1x256xi1> to vector<8x256xi1>
    %43 = vector.broadcast %cst_12 : f32 to vector<8x256xf32>
    %44 = arith.select %42, %43, %40 : vector<8x256xi1>, vector<8x256xf32>
    %c1_i32_13 = arith.constant 1 : i32
    %45 = tpu.dynamic_rotate %1 by %c1_i32_13 dim 1 : vector<8x256xf32>, i32 -> vector<8x256xf32>
    %cst_14 = arith.constant 0.000000e+00 : f32
    %46 = vector.shape_cast %7 : vector<1x256xi1> to vector<1x256xi1>
    %47 = vector.broadcast %46 : vector<1x256xi1> to vector<8x256xi1>
    %48 = vector.broadcast %cst_14 : f32 to vector<8x256xf32>
    %49 = arith.select %47, %48, %45 : vector<8x256xi1>, vector<8x256xf32>
    %c16_i32_15 = arith.constant 16 : i32
    %50 = tpu.dynamic_rotate %1 by %c16_i32_15 dim 1 : vector<8x256xf32>, i32 -> vector<8x256xf32>
    %cst_16 = arith.constant 0.000000e+00 : f32
    %51 = vector.shape_cast %9 : vector<1x256xi1> to vector<1x256xi1>
    %52 = vector.broadcast %51 : vector<1x256xi1> to vector<8x256xi1>
    %53 = vector.broadcast %cst_16 : f32 to vector<8x256xf32>
    %54 = arith.select %52, %53, %50 : vector<8x256xi1>, vector<8x256xf32>
    %c240_i32_17 = arith.constant 240 : i32
    %55 = tpu.dynamic_rotate %1 by %c240_i32_17 dim 1 : vector<8x256xf32>, i32 -> vector<8x256xf32>
    %cst_18 = arith.constant 0.000000e+00 : f32
    %56 = vector.shape_cast %11 : vector<1x256xi1> to vector<1x256xi1>
    %57 = vector.broadcast %56 : vector<1x256xi1> to vector<8x256xi1>
    %58 = vector.broadcast %cst_18 : f32 to vector<8x256xf32>
    %59 = arith.select %57, %58, %55 : vector<8x256xi1>, vector<8x256xf32>
    %60 = arith.subf %44, %49 : vector<8x256xf32>
    %61 = arith.subf %54, %59 : vector<8x256xf32>
    %62 = arith.mulf %60, %60 : vector<8x256xf32>
    %63 = arith.mulf %61, %61 : vector<8x256xf32>
    %64 = arith.addf %62, %63 : vector<8x256xf32>
    %cst_19 = arith.constant 4.000000e-06 : f32
    %65 = vector.broadcast %cst_19 : f32 to vector<8x256xf32>
    %66 = arith.addf %64, %65 : vector<8x256xf32>
    %67 = math.sqrt %66 : vector<8x256xf32>
    %68 = arith.subf %39, %67 : vector<8x256xf32>
    %69 = math.absf %68 : vector<8x256xf32>
    %cst_20 = arith.constant dense<0.000000e+00> : vector<256xf32>
    %70 = vector.multi_reduction <add>, %69, %cst_20 [0] : vector<8x256xf32> to vector<256xf32>
    %71 = vector.shape_cast %70 : vector<256xf32> to vector<1x256xf32>
    %72 = vector.shape_cast %71 : vector<1x256xf32> to vector<1x1x256xf32>
    %c0_21 = arith.constant 0 : index
    %c0_22 = arith.constant 0 : index
    %c0_23 = arith.constant 0 : index
    %73 = vector.load %arg4[%c0_21, %c0_22, %c0_23] : memref<1x1x256xf32, #tpu.memory_space<vmem>>, vector<1x1x256xf32>
    tpu.vector_store %arg4[%c0_21, %c0_22, %c0_23], %72 {strides = array<i32>} : memref<1x1x256xf32, #tpu.memory_space<vmem>>, vector<1x1x256xf32>,
    return
  }
  func.func @transform_0(%arg0: i32) -> (i32, i32) {
    %c0_i32 = arith.constant 0 : i32
    %c0_i32_0 = arith.constant 0 : i32
    %c0_i32_1 = arith.constant 0 : i32
    return %c0_i32, %c0_i32_0 : i32, i32
  }
  func.func @transform_1(%arg0: i32) -> (i32, i32) {
    %c0_i32 = arith.constant 0 : i32
    %c0_i32_0 = arith.constant 0 : i32
    return %arg0, %c0_i32 : i32, i32
  }
  func.func @transform_2(%arg0: i32) -> (i32, i32) {
    %c0_i32 = arith.constant 0 : i32
    %c0_i32_0 = arith.constant 0 : i32
    return %arg0, %c0_i32 : i32, i32
  }
  func.func @transform_3(%arg0: i32) -> (i32, i32, i32) {
    %c0_i32 = arith.constant 0 : i32
    %c0_i32_0 = arith.constant 0 : i32
    %c0_i32_1 = arith.constant 0 : i32
    return %arg0, %c0_i32, %c0_i32_0 : i32, i32, i32
  }
}

</mosaic_0001>

<llo_original>
// kernel: tpu_custom_call.1
$region0: #{tpu_custom_call.1}
  #allocation0 [shape = 'u32[]', space=smem, size = 0x4, offset = 0x4, fixed_abs, tag = 'smem constant byte address 0x4 - core index']
  #allocation1 [shape = 'u32[72,128]{1,0:T(1,128)}', space=vmem, size = 0x9000, scoped, tag = 'internal scratch']
  %s0 = inlined_call_operand.hbm [shape: s32[1,256], index: 0, kind: input, shape index: {}]
  %s1 = inlined_call_operand.hbm [shape: f32[8,256], index: 1, kind: input, shape index: {}]
  %s2 = inlined_call_operand.hbm [shape: f32[8,256], index: 2, kind: input, shape index: {}]
  %s3 = inlined_call_operand.hbm [shape: f32[1,1,256], index: 3, kind: output, shape index: {}]
  %s4 = sld [smem:[#allocation0]]
  $region34: #{tpu_custom_call.1} parent=0
    _
  %s6 = ssub.s32 1, %s4
  %s7 = scalar_select 0, %s6, %s4
  $region1: #{tpu_custom_call.1} parent=0
    #allocation2 [shape = 'u8[1024]{0}', space=vmem, size = 0x400, scoped, tag = 'input window, operand 0, single buffered']
    #allocation3 [shape = 's32[1]{0}', space=sflag, size = 0x4, scoped, tag = 'scoped memory for tpu_custom_call.1']
    #allocation4 [shape = 's32[1]{0}', space=sflag, size = 0x4, scoped, tag = 'scoped memory for tpu_custom_call.1']
    #allocation5 [shape = 'u8[8192]{0}', space=vmem, size = 0x2000, scoped, tag = 'input window, operand 1, single buffered']
    #allocation6 [shape = 's32[1]{0}', space=sflag, size = 0x4, scoped, tag = 'scoped memory for tpu_custom_call.1']
    #allocation7 [shape = 'u8[8192]{0}', space=vmem, size = 0x2000, scoped, tag = 'input window, operand 2, single buffered']
    #allocation8 [shape = 'u8[1024]{0}', space=vmem, size = 0x400, scoped, tag = 'output window, operand 0, single buffered']
    %8 = vsyncpa [#allocation3], 0
    %9 = vsyncpa [#allocation6], 0
    %10 = vsyncpa [#allocation4], 0
    // Predicated region
    $region2: #{tpu_custom_call.1} parent=1 // pred_check
      _
    $region3: #{tpu_custom_call.1} parent=1 // pred_check_branch
      %12 = sbr.rel (0) target = $region5
    $region4: #{tpu_custom_call.1} parent=1 // pred_region
      %14 = vsyncadd [#allocation3], 0
      %s16 = sshll.u32 %s0, 4
      %s17 = int_to_ptr.hbm [resolvable:$true] %s16
      %s18 = sshll.u32 [#allocation2], 4
      %s19 = int_to_ptr.vmem [resolvable:$true] %s18
      %21 = dma.hbm_to_vmem [thread:$0]  %s17, 32, %s19, [#allocation3]
    $region5: #{tpu_custom_call.1} parent=1 // pred_fallthru
      _
    // Predicated region
    $region6: #{tpu_custom_call.1} parent=1 // pred_check
      _
    $region7: #{tpu_custom_call.1} parent=1 // pred_check_branch
      %23 = sbr.rel (0) target = $region9
    $region8: #{tpu_custom_call.1} parent=1 // pred_region
      %25 = vsyncadd [#allocation6], 0
      %s27 = sshll.u32 %s1, 4
      %s28 = int_to_ptr.hbm [resolvable:$true] %s27
      %s29 = sshll.u32 [#allocation5], 4
      %s30 = int_to_ptr.vmem [resolvable:$true] %s29
      %32 = dma.hbm_to_vmem [thread:$0]  %s28, 256, %s30, [#allocation6]
    $region9: #{tpu_custom_call.1} parent=1 // pred_fallthru
      _
    // Predicated region
    $region10: #{tpu_custom_call.1} parent=1 // pred_check
      _
    $region11: #{tpu_custom_call.1} parent=1 // pred_check_branch
      %34 = sbr.rel (0) target = $region13
    $region12: #{tpu_custom_call.1} parent=1 // pred_region
      %36 = vsyncadd [#allocation6], 0
      %s38 = sshll.u32 %s2, 4
      %s39 = int_to_ptr.hbm [resolvable:$true] %s38
      %s40 = sshll.u32 [#allocation7], 4
      %s41 = int_to_ptr.vmem [resolvable:$true] %s40
      %43 = dma.hbm_to_vmem [thread:$0]  %s39, 256, %s41, [#allocation6]
    $region13: #{tpu_custom_call.1} parent=1 // pred_fallthru
      _
    // Predicated region
    $region14: #{tpu_custom_call.1} parent=1 // pred_check
      _
    $region15: #{tpu_custom_call.1} parent=1 // pred_check_branch
      %45 = sbr.rel (0) target = $region17
    $region16: #{tpu_custom_call.1} parent=1 // pred_region
      %47 = dma.done [#allocation3], 32
    $region17: #{tpu_custom_call.1} parent=1 // pred_fallthru
      _
    // Predicated region
    $region18: #{tpu_custom_call.1} parent=1 // pred_check
      _
    $region19: #{tpu_custom_call.1} parent=1 // pred_check_branch
      %49 = sbr.rel (0) target = $region21
    $region20: #{tpu_custom_call.1} parent=1 // pred_region
      %51 = dma.done [#allocation6], 256
    $region21: #{tpu_custom_call.1} parent=1 // pred_fallthru
      _
    // Predicated region
    $region22: #{tpu_custom_call.1} parent=1 // pred_check
      _
    $region23: #{tpu_custom_call.1} parent=1 // pred_check_branch
      %53 = sbr.rel (0) target = $region25
    $region24: #{tpu_custom_call.1} parent=1 // pred_region
      %55 = dma.done [#allocation6], 256
    $region25: #{tpu_custom_call.1} parent=1 // pred_fallthru
      _
    %v56 = vld [vmem:[#allocation5] sm:$0xff]
    %v57 = vld [vmem:[#allocation5 + $0x8] sm:$0xff]
    %v58 = vld [vmem:[#allocation7] sm:$0xff]
    %v59 = vld [vmem:[#allocation7 + $0x8] sm:$0xff]
    %v60 = vld [vmem:[#allocation2] sm:$0x3]
    %v61 = vlaneseq
    %v62 = vand.u32 %v61, 127
    %v63 = vadd.s32 %v62, 128
    %vm64 = vcmp.eq.s32.totalorder %v60, 15
    %vm65 = vcmp.eq.s32.totalorder %v60, 0
    %vm66 = vcmp.lt.s32.totalorder %v62, 16
    %vm67 = vcmp.lt.s32.totalorder %v63, 16
    %vm68 = vcmp.ge.s32.totalorder %v62, 240
    %vm69 = vcmp.ge.s32.totalorder %v63, 240
    %70 = vrot.lane.b32.xlu0 %v56, 127
    %v71 = vpop.permute.xlu0 %70
    %72 = vrot.lane.b32.xlu0 %v57, 127
    %v73 = vpop.permute.xlu0 %72
    %vm74 = vcmp.lt.s32.totalorder %v62, 127
    %v75 = vsel %vm74, %v71, %v73
    %v76 = vsel %vm74, %v73, %v71
    %v77 = vsel %vm64, 1, 0
    %v78 = vperm.slane %v77, 0
    %v79 = vperm.slane %v77, 1
    %vm80 = vcmp.eq.s32.totalorder %v78, 1
    %vm81 = vcmp.eq.s32.totalorder %v79, 1
    %v82 = vsel %vm80, 0.0, %v75
    %v83 = vsel %vm81, 0.0, %v76
    %84 = vrot.lane.b32.xlu0 %v56, 1
    %v85 = vpop.permute.xlu0 %84
    %86 = vrot.lane.b32.xlu0 %v57, 1
    %v87 = vpop.permute.xlu0 %86
    %vm88 = vcmp.lt.s32.totalorder %v62, 1
    %v89 = vsel %vm88, %v85, %v87
    %v90 = vsel %vm88, %v87, %v85
    %v91 = vsel %vm65, 1, 0
    %v92 = vperm.slane %v91, 0
    %v93 = vperm.slane %v91, 1
    %vm94 = vcmp.eq.s32.totalorder %v92, 1
    %vm95 = vcmp.eq.s32.totalorder %v93, 1
    %v96 = vsel %vm94, 0.0, %v90
    %v97 = vsel %vm95, 0.0, %v89
    %98 = vrot.lane.b32.xlu0 %v56, 16
    %v99 = vpop.permute.xlu0 %98
    %100 = vrot.lane.b32.xlu0 %v57, 16
    %v101 = vpop.permute.xlu0 %100
    %v102 = vsel %vm66, %v99, %v101
    %v103 = vsel %vm66, %v101, %v99
    %v104 = vsel %vm66, 1, 0
    %v105 = vsel %vm67, 1, 0
    %vm106 = vcmp.eq.s32.totalorder %v104, 1
    %vm107 = vcmp.eq.s32.totalorder %v105, 1
    %v108 = vsel %vm106, 0.0, %v103
    %v109 = vsel %vm107, 0.0, %v102
    %110 = vrot.lane.b32.xlu0 %v56, 112
    %v111 = vpop.permute.xlu0 %110
    %112 = vrot.lane.b32.xlu0 %v57, 112
    %v113 = vpop.permute.xlu0 %112
    %vm114 = vcmp.lt.s32.totalorder %v62, 112
    %v115 = vsel %vm114, %v111, %v113
    %v116 = vsel %vm114, %v113, %v111
    %v117 = vsel %vm68, 1, 0
    %v118 = vsel %vm69, 1, 0
    %vm119 = vcmp.eq.s32.totalorder %v117, 1
    %vm120 = vcmp.eq.s32.totalorder %v118, 1
    %v121 = vsel %vm119, 0.0, %v115
    %v122 = vsel %vm120, 0.0, %v116
    %v123 = vsub.f32 %v82, %v96
    %v124 = vsub.f32 %v83, %v97
    %v125 = vsub.f32 %v108, %v121
    %v126 = vsub.f32 %v109, %v122
    %v127 = vmul.f32 %v123, %v123
    %v128 = vmul.f32 %v124, %v124
    %v129 = vmul.f32 %v125, %v125
    %v130 = vmul.f32 %v126, %v126
    %v131 = vadd.f32 %v127, %v129
    %v132 = vadd.f32 %v128, %v130
    %v133 = vadd.f32 %v131, 4e-06
    %v134 = vadd.f32 %v132, 4e-06
    %v135 = vrsqrt.pop %v133
    %v136 = vmul.f32 %v135, %v133
    %v137 = vmul.f32 %v136, %v135
    %v138 = vmul.f32 0.5, %v137
    %v139 = vsub.f32 1.5, %v138
    %v140 = vmul.f32 %v135, %v139
    %v141 = vmul.f32 %v133, %v140
    %vm142 = vcmp.eq.f32.partialorder %v133, inf
    %v143 = vsel %vm142, %v133, %v141
    %vm144 = vcmp.eq.f32.partialorder %v133, 0.0
    %v145 = vand.u32 %v133, 2147483648
    %v146 = vsel %vm144, %v145, %v143
    %v147 = vrsqrt.pop %v134
    %v148 = vmul.f32 %v147, %v134
    %v149 = vmul.f32 %v148, %v147
    %v150 = vmul.f32 0.5, %v149
    %v151 = vsub.f32 1.5, %v150
    %v152 = vmul.f32 %v147, %v151
    %v153 = vmul.f32 %v134, %v152
    %vm154 = vcmp.eq.f32.partialorder %v134, inf
    %v155 = vsel %vm154, %v134, %v153
    %vm156 = vcmp.eq.f32.partialorder %v134, 0.0
    %v157 = vand.u32 %v134, 2147483648
    %v158 = vsel %vm156, %v157, %v155
    %159 = vrot.lane.b32.xlu0 %v58, 127
    %v160 = vpop.permute.xlu0 %159
    %161 = vrot.lane.b32.xlu0 %v59, 127
    %v162 = vpop.permute.xlu0 %161
    %v163 = vsel %vm74, %v160, %v162
    %v164 = vsel %vm74, %v162, %v160
    %v165 = vsel %vm80, 0.0, %v163
    %v166 = vsel %vm81, 0.0, %v164
    %167 = vrot.lane.b32.xlu0 %v58, 1
    %v168 = vpop.permute.xlu0 %167
    %169 = vrot.lane.b32.xlu0 %v59, 1
    %v170 = vpop.permute.xlu0 %169
    %v171 = vsel %vm88, %v168, %v170
    %v172 = vsel %vm88, %v170, %v168
    %v173 = vsel %vm94, 0.0, %v172
    %v174 = vsel %vm95, 0.0, %v171
    %175 = vrot.lane.b32.xlu0 %v58, 16
    %v176 = vpop.permute.xlu0 %175
    %177 = vrot.lane.b32.xlu0 %v59, 16
    %v178 = vpop.permute.xlu0 %177
    %v179 = vsel %vm66, %v176, %v178
    %v180 = vsel %vm66, %v178, %v176
    %v181 = vsel %vm106, 0.0, %v180
    %v182 = vsel %vm107, 0.0, %v179
    %183 = vrot.lane.b32.xlu0 %v58, 112
    %v184 = vpop.permute.xlu0 %183
    %185 = vrot.lane.b32.xlu0 %v59, 112
    %v186 = vpop.permute.xlu0 %185
    %v187 = vsel %vm114, %v184, %v186
    %v188 = vsel %vm114, %v186, %v184
    %v189 = vsel %vm119, 0.0, %v187
    %v190 = vsel %vm120, 0.0, %v188
    %v191 = vsub.f32 %v165, %v173
    %v192 = vsub.f32 %v166, %v174
    %v193 = vsub.f32 %v181, %v189
    %v194 = vsub.f32 %v182, %v190
    %v195 = vmul.f32 %v191, %v191
    %v196 = vmul.f32 %v192, %v192
    %v197 = vmul.f32 %v193, %v193
    %v198 = vmul.f32 %v194, %v194
    %v199 = vadd.f32 %v195, %v197
    %v200 = vadd.f32 %v196, %v198
    %v201 = vadd.f32 %v199, 4e-06
    %v202 = vadd.f32 %v200, 4e-06
    %v203 = vrsqrt.pop %v201
    %v204 = vmul.f32 %v203, %v201
    %v205 = vmul.f32 %v204, %v203
    %v206 = vmul.f32 0.5, %v205
    %v207 = vsub.f32 1.5, %v206
    %v208 = vmul.f32 %v203, %v207
    %v209 = vmul.f32 %v201, %v208
    %vm210 = vcmp.eq.f32.partialorder %v201, inf
    %v211 = vsel %vm210, %v201, %v209
    %vm212 = vcmp.eq.f32.partialorder %v201, 0.0
    %v213 = vand.u32 %v201, 2147483648
    %v214 = vsel %vm212, %v213, %v211
    %v215 = vrsqrt.pop %v202
    %v216 = vmul.f32 %v215, %v202
    %v217 = vmul.f32 %v216, %v215
    %v218 = vmul.f32 0.5, %v217
    %v219 = vsub.f32 1.5, %v218
    %v220 = vmul.f32 %v215, %v219
    %v221 = vmul.f32 %v202, %v220
    %vm222 = vcmp.eq.f32.partialorder %v202, inf
    %v223 = vsel %vm222, %v202, %v221
    %vm224 = vcmp.eq.f32.partialorder %v202, 0.0
    %v225 = vand.u32 %v202, 2147483648
    %v226 = vsel %vm224, %v225, %v223
    %v227 = vsub.f32 %v146, %v214
    %v228 = vsub.f32 %v158, %v226
    %v229 = vand.u32 2147483647, %v227
    %v230 = vand.u32 2147483647, %v228
    %v231 = vrot.slane %v229, 4
    %v232 = vadd.f32 %v229, %v231
    %v233 = vrot.slane %v232, 2
    %v234 = vadd.f32 %v232, %v233
    %v235 = vrot.slane %v234, 1
    %v236 = vadd.f32 %v234, %v235
    %v237 = vrot.slane %v230, 4
    %v238 = vadd.f32 %v230, %v237
    %v239 = vrot.slane %v238, 2
    %v240 = vadd.f32 %v238, %v239
    %v241 = vrot.slane %v240, 1
    %v242 = vadd.f32 %v240, %v241
    %v245 = vrot.slane %v242, 7
    %vm246 = vcmask 1040384
    %v247 = vsel %vm246, %v236, %v245
    %v249 = vlaneseq
    %vm250 = vcmp.ge.s32.totalorder %v249, 0
    %vm251 = vcmp.lt.s32.totalorder %v249, 256
    %vm252 = vmand %vm250, %vm251
    %253 = vst.msk [vmem:[#allocation8] sm:$0x3] %vm252, %v247
    // Predicated region
    $region26: #{tpu_custom_call.1} parent=1 // pred_check
      _
    $region27: #{tpu_custom_call.1} parent=1 // pred_check_branch
      %255 = sbr.rel (0) target = $region29
    $region28: #{tpu_custom_call.1} parent=1 // pred_region
      %257 = vsyncadd [#allocation4], 0
      %s259 = sshll.u32 [#allocation8], 4
      %s260 = int_to_ptr.vmem [resolvable:$true] %s259
      %s261 = sshll.u32 %s3, 4
      %s262 = int_to_ptr.hbm [resolvable:$true] %s261
      %264 = dma.vmem_to_hbm [thread:$0]  %s260, 32, %s262, [#allocation4]
    $region29: #{tpu_custom_call.1} parent=1 // pred_fallthru
      _
    // Predicated region
    $region30: #{tpu_custom_call.1} parent=1 // pred_check
      _
    $region31: #{tpu_custom_call.1} parent=1 // pred_check_branch
      %266 = sbr.rel (0) target = $region33
    $region32: #{tpu_custom_call.1} parent=1 // pred_region
      %268 = dma.done [#allocation4], 32
    $region33: #{tpu_custom_call.1} parent=1 // pred_fallthru
      _
    %269 = vsyncpa [#allocation3], 1
    %270 = vsyncpa [#allocation6], 1
    %271 = vsyncpa [#allocation4], 1

</llo_original>
